<compile_context>
chip_gen: v5e
topology: v5e:2x2
jax: 0.10.0
libtpu: 0.0.40
codegen_flags: <defaults>
</compile_context>

<pallas_src>
import functools

import jax
import jax.numpy as jnp
from jax.experimental import pallas as pl
from jax.experimental.pallas import tpu as pltpu

EPS = 1e-5

# VMEM budgets kept conservative so the same tiling fits v7x (64 MiB physical
# VMEM); v5e/v6e have 128 MiB so this is trivially safe there too.
_TILE_VMEM_BUDGET = 32 * 1024 * 1024   # input/output/cast-temp tiles
_VMEM_LIMIT_BYTES = 48 * 1024 * 1024
_MAX_TILE_B = 8192
_SUBLANE = 32            # covers sublane packing for int8(32)/bf16(16)/f32(8)
_LANE_X = 896            # 784 lane-padded to a multiple of 128
_LANE_OUT = 128          # 10 lane-padded


def _round_up(n, m):
    return ((n + m - 1) // m) * m


# ---------------------------------------------------------------------------
# Kernel
# ---------------------------------------------------------------------------
def _dnn_kernel(x_ref,
                w1_ref, b1_ref,
                w2_ref, b2_ref,
                w3_ref, b3_ref,
                w4_ref, b4_ref,
                out_ref, *, x_scale):
    """Fused 4-layer MLP (BN folded into W/b) + ReLU + log_softmax on one tile.

    x_ref: (TILE_B, 784) int8/uint8/bf16/f32; wN_ref: (in, out) bf16;
    bN_ref: (1, out) f32; out_ref: (TILE_B, 10) f32.
    """
    x = x_ref[...]
    # In-kernel dequant/cast: the kernel is HBM-bound on x and the VPU is idle,
    # so converting int8/f32 -> bf16 here is free and keeps the HBM stream narrow.
    if x.dtype != jnp.bfloat16 or x_scale != 1.0:
        x = x.astype(jnp.float32)
        if x_scale != 1.0:
            x = x * jnp.float32(x_scale)
    x = x.astype(jnp.bfloat16)

    # --- layer 1: Linear(784, 30) [BN1 folded] + ReLU (bf16 x bf16 -> f32) ---
    h = jnp.dot(x, w1_ref[...], preferred_element_type=jnp.float32) + b1_ref[...]
    h = jnp.maximum(h, 0.0).astype(jnp.bfloat16)

    # --- layer 2: Linear(30, 30) [BN2 folded] + ReLU ---
    h = jnp.dot(h, w2_ref[...], preferred_element_type=jnp.float32) + b2_ref[...]
    h = jnp.maximum(h, 0.0).astype(jnp.bfloat16)

    # --- layer 3: Linear(30, 10) [BN3 folded] + ReLU ---
    h = jnp.dot(h, w3_ref[...], preferred_element_type=jnp.float32) + b3_ref[...]
    h = jnp.maximum(h, 0.0).astype(jnp.bfloat16)

    # --- layer 4: Linear(10, 10) ---
    logits = jnp.dot(h, w4_ref[...], preferred_element_type=jnp.float32) + b4_ref[...]

    # --- log_softmax over dim=1 (lane axis) ---
    m = jnp.max(logits, axis=-1, keepdims=True)
    z = logits - m
    out_ref[...] = z - jnp.log(jnp.sum(jnp.exp(z), axis=-1, keepdims=True))


# ---------------------------------------------------------------------------
# Parameters
# ---------------------------------------------------------------------------
def init_params(key):
    """Deterministic parameter init matching the PyTorch module's shapes."""
    dims = [(784, 30), (30, 30), (30, 10), (10, 10)]
    params = {}
    for i, (fan_in, fan_out) in enumerate(dims, start=1):
        key, kw, kb = jax.random.split(key, 3)
        bound = 1.0 / jnp.sqrt(float(fan_in))
        # PyTorch nn.Linear stores weight as (out, in).
        params[f"w{i}"] = jax.random.uniform(
            kw, (fan_out, fan_in), jnp.float32, -bound, bound)
        params[f"b{i}"] = jax.random.uniform(
            kb, (fan_out,), jnp.float32, -bound, bound)
    # BatchNorm1d params + running stats (eval mode)
    for i, f in zip((1, 2, 3), (30, 30, 10)):
        key, kg, kb, km, kv = jax.random.split(key, 5)
        params[f"bn{i}_gamma"] = 1.0 + 0.1 * jax.random.normal(kg, (f,), jnp.float32)
        params[f"bn{i}_beta"] = 0.1 * jax.random.normal(kb, (f,), jnp.float32)
        params[f"bn{i}_mean"] = 0.1 * jax.random.normal(km, (f,), jnp.float32)
        params[f"bn{i}_var"] = jnp.abs(
            1.0 + 0.1 * jax.random.normal(kv, (f,), jnp.float32))
    return params


def prepare_params(params):
    """One-time prep: transpose to (in, out), fold BN(eval) into W/b, cast W to bf16.

    BN eval: y = (x - mean) / sqrt(var + eps) * gamma + beta = x*scale + shift,
    folded into the preceding Linear: W' = W*scale (column-wise), b' = b*scale + shift.
    """
    def bn_fold(i):
        scale = params[f"bn{i}_gamma"] / jnp.sqrt(params[f"bn{i}_var"] + EPS)
        shift = params[f"bn{i}_beta"] - params[f"bn{i}_mean"] * scale
        return scale, shift

    prep = {}
    for i in (1, 2, 3, 4):
        w = params[f"w{i}"].T.astype(jnp.float32)        # (in, out)
        b = params[f"b{i}"].astype(jnp.float32)
        if i <= 3:
            scale, shift = bn_fold(i)
            w = w * scale[None, :]
            b = b * scale + shift
        # bf16 weights: halves HBM/VMEM for W1 and removes multi-pass f32 MXU
        # work for the small layers; all dots still accumulate in f32.
        prep[f"w{i}"] = w.astype(jnp.bfloat16)
        prep[f"b{i}"] = b.reshape(1, -1).astype(jnp.float32)
    return prep


# ---------------------------------------------------------------------------
# Wrapper
# ---------------------------------------------------------------------------
def _choose_tile_b(B, x_itemsize):
    """Largest batch tile that fits the conservative VMEM budget (v7x-safe)."""
    # Per-row VMEM bytes: 2 double-buffered input tiles + worst-case cast temps
    # (f32 + bf16 copies of the tile) + 2 double-buffered f32 output tiles.
    per_row = _LANE_X * (2 * x_itemsize + 6) + 2 * _LANE_OUT * 4
    max_tile = (_TILE_VMEM_BUDGET // per_row) // _SUBLANE * _SUBLANE
    max_tile = max(_SUBLANE, min(_MAX_TILE_B, max_tile))
    if B <= 1024:
        return min(_round_up(max(B, 1), _SUBLANE), max_tile)
    # Prefer >= 2 tiles so the ("parallel",) grid can feed both v7x TensorCores.
    return min(max_tile, _round_up((B + 1) // 2, 256))


def _run(x2d, prep, tile_b, n_tiles, x_scale):
    """One pallas_call over `n_tiles` full (tile_b, 784) tiles of x2d."""
    rows = n_tiles * tile_b
    x_itemsize = x2d.dtype.itemsize
    args = (x2d,
            prep["w1"], prep["b1"], prep["w2"], prep["b2"],
            prep["w3"], prep["b3"], prep["w4"], prep["b4"])
    # x streams per batch tile (double-buffered by Pallas); weights/biases use
    # constant index_maps so they stay VMEM-resident across grid steps.
    in_specs = [pl.BlockSpec((tile_b, 784), lambda i: (i, 0))] + [
        pl.BlockSpec(a.shape, lambda i: (0, 0)) for a in args[1:]]
    param_bytes = sum(int(a.size) * a.dtype.itemsize for a in args[1:])
    cost = pl.CostEstimate(
        flops=2 * rows * (784 * 30 + 30 * 30 + 30 * 10 + 10 * 10),
        transcendentals=11 * rows,                      # 10x exp + 1x log per row
        bytes_accessed=rows * (784 * x_itemsize + 10 * 4) + param_bytes)
    return pl.pallas_call(
        functools.partial(_dnn_kernel, x_scale=x_scale),
        out_shape=jax.ShapeDtypeStruct((rows, 10), jnp.float32),
        grid=(n_tiles,),
        in_specs=in_specs,
        out_specs=pl.BlockSpec((tile_b, 10), lambda i: (i, 0)),
        compiler_params=pltpu.CompilerParams(
            dimension_semantics=("parallel",),   # shard batch tiles across v7x TCs
            vmem_limit_bytes=_VMEM_LIMIT_BYTES),
        cost_estimate=cost,
    )(*args)


def dnn_forward(x, prep, *, tile_b=None, x_scale=1.0):
    """DNN.forward where the logical float input is `x.astype(f32) * x_scale`.

    x: (B, 1, 28, 28) (or anything flattening to (B, 784)); dtype may be
    int8/uint8 (quantized pixels, dequantized in-kernel), bf16 or f32 — the
    kernel reads whatever is stored, so no wrapper-side cast/copy of x is made.
    """
    B = x.shape[0]
    x2d = x.reshape(B, 784)
    if tile_b is None:
        tile_b = _choose_tile_b(B, x2d.dtype.itemsize)

    n_full = B // tile_b
    outs = []
    if n_full > 0:
        # Full tiles are read straight out of the original (un-padded) array.
        outs.append(_run(x2d, prep, tile_b, n_full, x_scale))
    tail = B - n_full * tile_b
    if tail > 0:
        # Pad ONLY the tail rows (never the full array) to a sublane multiple.
        tail_rows = _round_up(tail, _SUBLANE)
        x_tail = x2d[n_full * tile_b:]
        x_tail = jnp.pad(x_tail, ((0, tail_rows - tail), (0, 0)))
        outs.append(_run(x_tail, prep, tail_rows, 1, x_scale)[:tail])
    return outs[0] if len(outs) == 1 else jnp.concatenate(outs, axis=0)


# ---------------------------------------------------------------------------
# References
# ---------------------------------------------------------------------------
def dnn_reference(x, prep, x_scale=1.0):
    """Plain-JAX reference with the SAME numerics as the kernel (bf16 matmuls)."""
    B = x.shape[0]
    h = (x.reshape(B, 784).astype(jnp.float32) * x_scale).astype(jnp.bfloat16)
    h = jnp.maximum(
        jnp.dot(h, prep["w1"], preferred_element_type=jnp.float32) + prep["b1"],
        0.0).astype(jnp.bfloat16)
    h = jnp.maximum(
        jnp.dot(h, prep["w2"], preferred_element_type=jnp.float32) + prep["b2"],
        0.0).astype(jnp.bfloat16)
    h = jnp.maximum(
        jnp.dot(h, prep["w3"], preferred_element_type=jnp.float32) + prep["b3"],
        0.0).astype(jnp.bfloat16)
    logits = jnp.dot(h, prep["w4"], preferred_element_type=jnp.float32) + prep["b4"]
    return jax.nn.log_softmax(logits, axis=1)


def dnn_reference_f32(x, params, x_scale=1.0):
    """Full-f32 PyTorch-semantics reference (un-folded eval-mode BatchNorm)."""
    B = x.shape[0]
    h = x.reshape(B, 784).astype(jnp.float32) * x_scale
    for i, has_bn in ((1, True), (2, True), (3, True), (4, False)):
        h = h @ params[f"w{i}"].T + params[f"b{i}"]
        if has_bn:
            scale = params[f"bn{i}_gamma"] / jnp.sqrt(params[f"bn{i}_var"] + EPS)
            shift = params[f"bn{i}_beta"] - params[f"bn{i}_mean"] * scale
            h = jnp.maximum(h * scale + shift, 0.0)
    return jax.nn.log_softmax(h, axis=1)


# ---------------------------------------------------------------------------
# Demo / checks
# ---------------------------------------------------------------------------
if __name__ == "__main__":
    key = jax.random.PRNGKey(0)
    kp, kx1, kx2 = jax.random.split(key, 3)
    params = init_params(kp)
    prep = prepare_params(params)   # one-time fold/transpose/cast, outside the hot path

    # --- Primary path: int8 "pixel" input, dequantized in-kernel (narrowest HBM stream).
    B = 8
    x_q = jax.random.randint(kx1, (B, 1, 28, 28), 0, 128).astype(jnp.int8)
    scale = 1.0 / 127.0
    out = jax.block_until_ready(dnn_forward(x_q, prep, x_scale=scale))
    assert out.shape == (B, 10)

    ref = dnn_reference(x_q, prep, x_scale=scale)
    assert jnp.allclose(out, ref, atol=2e-3, rtol=2e-3), "mismatch vs bf16 reference"

    ref32 = dnn_reference_f32(x_q, params, x_scale=scale)
    assert jnp.allclose(out, ref32, atol=5e-2, rtol=5e-2), "mismatch vs f32 reference"

    # --- Float path + main/tail split (B not a multiple of tile_b).
    B2 = 72
    x_f = jax.random.normal(kx2, (B2, 1, 28, 28), jnp.float32)
    out2 = jax.block_until_ready(dnn_forward(x_f, prep, tile_b=32))
    assert out2.shape == (B2, 10)
    ref2 = dnn_reference(x_f, prep)
    assert jnp.allclose(out2, ref2, atol=2e-3, rtol=2e-3), "mismatch (split-tile path)"

    print("KERNEL_OK")
</pallas_src>

<mosaic_0001>
module attributes {stable_mosaic.version = 11 : i64} {
  func.func @_dnn_kernel(%arg0: i32, %arg1: memref<32x784xi8, #tpu.memory_space<vmem>>, %arg2: memref<784x30xbf16, #tpu.memory_space<vmem>>, %arg3: memref<1x30xf32, #tpu.memory_space<vmem>>, %arg4: memref<30x30xbf16, #tpu.memory_space<vmem>>, %arg5: memref<1x30xf32, #tpu.memory_space<vmem>>, %arg6: memref<30x10xbf16, #tpu.memory_space<vmem>>, %arg7: memref<1x10xf32, #tpu.memory_space<vmem>>, %arg8: memref<10x10xbf16, #tpu.memory_space<vmem>>, %arg9: memref<1x10xf32, #tpu.memory_space<vmem>>, %arg10: memref<32x10xf32, #tpu.memory_space<vmem>>) attributes {dimension_semantics = [#tpu.dimension_semantics<parallel>], iteration_bounds = array<i64: 1>, scalar_prefetch = 0 : i64, scratch_operands = 0 : i64, tpu.core_type = #tpu.core_type<tc>, window_params = [{transform_indices = @transform_0, window_bounds = array<i64: 32, 784>}, {pipeline_mode = #tpu.pipeline_mode<synchronous>, transform_indices = @transform_1, window_bounds = array<i64: 784, 30>}, {pipeline_mode = #tpu.pipeline_mode<synchronous>, transform_indices = @transform_2, window_bounds = array<i64: 1, 30>}, {pipeline_mode = #tpu.pipeline_mode<synchronous>, transform_indices = @transform_3, window_bounds = array<i64: 30, 30>}, {pipeline_mode = #tpu.pipeline_mode<synchronous>, transform_indices = @transform_4, window_bounds = array<i64: 1, 30>}, {pipeline_mode = #tpu.pipeline_mode<synchronous>, transform_indices = @transform_5, window_bounds = array<i64: 30, 10>}, {pipeline_mode = #tpu.pipeline_mode<synchronous>, transform_indices = @transform_6, window_bounds = array<i64: 1, 10>}, {pipeline_mode = #tpu.pipeline_mode<synchronous>, transform_indices = @transform_7, window_bounds = array<i64: 10, 10>}, {pipeline_mode = #tpu.pipeline_mode<synchronous>, transform_indices = @transform_8, window_bounds = array<i64: 1, 10>}, {transform_indices = @transform_9, window_bounds = array<i64: 32, 10>}]} {
    %c0 = arith.constant 0 : index
    %c0_0 = arith.constant 0 : index
    %0 = vector.load %arg1[%c0, %c0_0] : memref<32x784xi8, #tpu.memory_space<vmem>>, vector<32x784xi8>
    %1 = arith.sitofp %0 : vector<32x784xi8> to vector<32x784xf32>
    %cst = arith.constant 0.00787401571 : f32
    %2 = vector.broadcast %cst : f32 to vector<32x784xf32>
    %3 = arith.mulf %1, %2 : vector<32x784xf32>
    %4 = arith.truncf %3 : vector<32x784xf32> to vector<32x784xbf16>
    %c0_1 = arith.constant 0 : index
    %c0_2 = arith.constant 0 : index
    %5 = vector.load %arg2[%c0_1, %c0_2] : memref<784x30xbf16, #tpu.memory_space<vmem>>, vector<784x30xbf16>
    %cst_3 = arith.constant dense<0.000000e+00> : vector<32x30xf32>
    %6 = tpu.matmul %4, %5, %cst_3 {dimension_numbers = #tpu.dot_dimension_numbers<[1], [0], [0], [1], [0, 0, 1, 1], [], []>} : vector<32x784xbf16>, vector<784x30xbf16>, vector<32x30xf32> -> vector<32x30xf32>
    %c0_4 = arith.constant 0 : index
    %c0_5 = arith.constant 0 : index
    %7 = vector.load %arg3[%c0_4, %c0_5] : memref<1x30xf32, #tpu.memory_space<vmem>>, vector<1x30xf32>
    %8 = vector.broadcast %7 : vector<1x30xf32> to vector<32x30xf32>
    %9 = arith.addf %6, %8 : vector<32x30xf32>
    %cst_6 = arith.constant 0.000000e+00 : f32
    %10 = vector.broadcast %cst_6 : f32 to vector<32x30xf32>
    %11 = arith.maximumf %9, %10 : vector<32x30xf32>
    %12 = arith.truncf %11 : vector<32x30xf32> to vector<32x30xbf16>
    %c0_7 = arith.constant 0 : index
    %c0_8 = arith.constant 0 : index
    %13 = vector.load %arg4[%c0_7, %c0_8] : memref<30x30xbf16, #tpu.memory_space<vmem>>, vector<30x30xbf16>
    %cst_9 = arith.constant dense<0.000000e+00> : vector<32x30xf32>
    %14 = tpu.matmul %12, %13, %cst_9 {dimension_numbers = #tpu.dot_dimension_numbers<[1], [0], [0], [1], [0, 0, 1, 1], [], []>} : vector<32x30xbf16>, vector<30x30xbf16>, vector<32x30xf32> -> vector<32x30xf32>
    %c0_10 = arith.constant 0 : index
    %c0_11 = arith.constant 0 : index
    %15 = vector.load %arg5[%c0_10, %c0_11] : memref<1x30xf32, #tpu.memory_space<vmem>>, vector<1x30xf32>
    %16 = vector.broadcast %15 : vector<1x30xf32> to vector<32x30xf32>
    %17 = arith.addf %14, %16 : vector<32x30xf32>
    %cst_12 = arith.constant 0.000000e+00 : f32
    %18 = vector.broadcast %cst_12 : f32 to vector<32x30xf32>
    %19 = arith.maximumf %17, %18 : vector<32x30xf32>
    %20 = arith.truncf %19 : vector<32x30xf32> to vector<32x30xbf16>
    %c0_13 = arith.constant 0 : index
    %c0_14 = arith.constant 0 : index
    %21 = vector.load %arg6[%c0_13, %c0_14] : memref<30x10xbf16, #tpu.memory_space<vmem>>, vector<30x10xbf16>
    %cst_15 = arith.constant dense<0.000000e+00> : vector<32x10xf32>
    %22 = tpu.matmul %20, %21, %cst_15 {dimension_numbers = #tpu.dot_dimension_numbers<[1], [0], [0], [1], [0, 0, 1, 1], [], []>} : vector<32x30xbf16>, vector<30x10xbf16>, vector<32x10xf32> -> vector<32x10xf32>
    %c0_16 = arith.constant 0 : index
    %c0_17 = arith.constant 0 : index
    %23 = vector.load %arg7[%c0_16, %c0_17] : memref<1x10xf32, #tpu.memory_space<vmem>>, vector<1x10xf32>
    %24 = vector.broadcast %23 : vector<1x10xf32> to vector<32x10xf32>
    %25 = arith.addf %22, %24 : vector<32x10xf32>
    %cst_18 = arith.constant 0.000000e+00 : f32
    %26 = vector.broadcast %cst_18 : f32 to vector<32x10xf32>
    %27 = arith.maximumf %25, %26 : vector<32x10xf32>
    %28 = arith.truncf %27 : vector<32x10xf32> to vector<32x10xbf16>
    %c0_19 = arith.constant 0 : index
    %c0_20 = arith.constant 0 : index
    %29 = vector.load %arg8[%c0_19, %c0_20] : memref<10x10xbf16, #tpu.memory_space<vmem>>, vector<10x10xbf16>
    %cst_21 = arith.constant dense<0.000000e+00> : vector<32x10xf32>
    %30 = tpu.matmul %28, %29, %cst_21 {dimension_numbers = #tpu.dot_dimension_numbers<[1], [0], [0], [1], [0, 0, 1, 1], [], []>} : vector<32x10xbf16>, vector<10x10xbf16>, vector<32x10xf32> -> vector<32x10xf32>
    %c0_22 = arith.constant 0 : index
    %c0_23 = arith.constant 0 : index
    %31 = vector.load %arg9[%c0_22, %c0_23] : memref<1x10xf32, #tpu.memory_space<vmem>>, vector<1x10xf32>
    %32 = vector.broadcast %31 : vector<1x10xf32> to vector<32x10xf32>
    %33 = arith.addf %30, %32 : vector<32x10xf32>
    %cst_24 = arith.constant dense<0xFF800000> : vector<32xf32>
    %34 = vector.multi_reduction <maximumf>, %33, %cst_24 [1] : vector<32x10xf32> to vector<32xf32>
    %35 = vector.shape_cast %34 : vector<32xf32> to vector<32x1xf32>
    %36 = vector.broadcast %35 : vector<32x1xf32> to vector<32x10xf32>
    %37 = arith.subf %33, %36 : vector<32x10xf32>
    %38 = math.exp %37 : vector<32x10xf32>
    %cst_25 = arith.constant dense<0.000000e+00> : vector<32xf32>
    %39 = vector.multi_reduction <add>, %38, %cst_25 [1] : vector<32x10xf32> to vector<32xf32>
    %40 = vector.shape_cast %39 : vector<32xf32> to vector<32x1xf32>
    %41 = math.log %40 : vector<32x1xf32>
    %42 = vector.broadcast %41 : vector<32x1xf32> to vector<32x10xf32>
    %43 = arith.subf %37, %42 : vector<32x10xf32>
    %c0_26 = arith.constant 0 : index
    %c0_27 = arith.constant 0 : index
    %44 = vector.load %arg10[%c0_26, %c0_27] : memref<32x10xf32, #tpu.memory_space<vmem>>, vector<32x10xf32>
    tpu.vector_store %arg10[%c0_26, %c0_27], %43 {strides = array<i32>} : memref<32x10xf32, #tpu.memory_space<vmem>>, vector<32x10xf32>,
    return
  }
  func.func @transform_0(%arg0: i32) -> (i32, i32) {
    %c0_i32 = arith.constant 0 : i32
    %c0_i32_0 = arith.constant 0 : i32
    return %arg0, %c0_i32 : i32, i32
  }
  func.func @transform_1(%arg0: i32) -> (i32, i32) {
    %c0_i32 = arith.constant 0 : i32
    %c0_i32_0 = arith.constant 0 : i32
    %c0_i32_1 = arith.constant 0 : i32
    return %c0_i32, %c0_i32_0 : i32, i32
  }
  func.func @transform_2(%arg0: i32) -> (i32, i32) {
    %c0_i32 = arith.constant 0 : i32
    %c0_i32_0 = arith.constant 0 : i32
    %c0_i32_1 = arith.constant 0 : i32
    return %c0_i32, %c0_i32_0 : i32, i32
  }
  func.func @transform_3(%arg0: i32) -> (i32, i32) {
    %c0_i32 = arith.constant 0 : i32
    %c0_i32_0 = arith.constant 0 : i32
    %c0_i32_1 = arith.constant 0 : i32
    return %c0_i32, %c0_i32_0 : i32, i32
  }
  func.func @transform_4(%arg0: i32) -> (i32, i32) {
    %c0_i32 = arith.constant 0 : i32
    %c0_i32_0 = arith.constant 0 : i32
    %c0_i32_1 = arith.constant 0 : i32
    return %c0_i32, %c0_i32_0 : i32, i32
  }
  func.func @transform_5(%arg0: i32) -> (i32, i32) {
    %c0_i32 = arith.constant 0 : i32
    %c0_i32_0 = arith.constant 0 : i32
    %c0_i32_1 = arith.constant 0 : i32
    return %c0_i32, %c0_i32_0 : i32, i32
  }
  func.func @transform_6(%arg0: i32) -> (i32, i32) {
    %c0_i32 = arith.constant 0 : i32
    %c0_i32_0 = arith.constant 0 : i32
    %c0_i32_1 = arith.constant 0 : i32
    return %c0_i32, %c0_i32_0 : i32, i32
  }
  func.func @transform_7(%arg0: i32) -> (i32, i32) {
    %c0_i32 = arith.constant 0 : i32
    %c0_i32_0 = arith.constant 0 : i32
    %c0_i32_1 = arith.constant 0 : i32
    return %c0_i32, %c0_i32_0 : i32, i32
  }
  func.func @transform_8(%arg0: i32) -> (i32, i32) {
    %c0_i32 = arith.constant 0 : i32
    %c0_i32_0 = arith.constant 0 : i32
    %c0_i32_1 = arith.constant 0 : i32
    return %c0_i32, %c0_i32_0 : i32, i32
  }
  func.func @transform_9(%arg0: i32) -> (i32, i32) {
    %c0_i32 = arith.constant 0 : i32
    %c0_i32_0 = arith.constant 0 : i32
    return %arg0, %c0_i32 : i32, i32
  }
}

</mosaic_0001>

<llo_original>
// kernel: tpu_custom_call.1
$region0: #{tpu_custom_call.1}
  #allocation0 [shape = 'u32[]', space=smem, size = 0x4, offset = 0x4, fixed_abs, tag = 'smem constant byte address 0x4 - core index']
  #allocation1 [shape = 'u32[72,128]{1,0:T(1,128)}', space=vmem, size = 0x9000, scoped, tag = 'internal scratch']
  %s0 = inlined_call_operand.vmem [shape: s8[32,784], index: 0, kind: input, shape index: {}]
  %s1 = inlined_call_operand.vmem [shape: bf16[784,30], index: 1, kind: input, shape index: {}]
  %s2 = inlined_call_operand.vmem [shape: f32[1,30], index: 2, kind: input, shape index: {}]
  %s3 = inlined_call_operand.vmem [shape: bf16[30,30], index: 3, kind: input, shape index: {}]
  %s4 = inlined_call_operand.vmem [shape: f32[1,30], index: 4, kind: input, shape index: {}]
  %s5 = inlined_call_operand.vmem [shape: bf16[30,10], index: 5, kind: input, shape index: {}]
  %s6 = inlined_call_operand.vmem [shape: f32[1,10], index: 6, kind: input, shape index: {}]
  %s7 = inlined_call_operand.vmem [shape: bf16[10,10], index: 7, kind: input, shape index: {}]
  %s8 = inlined_call_operand.vmem [shape: f32[1,10], index: 8, kind: input, shape index: {}]
  %s9 = inlined_call_operand.vmem [shape: f32[32,10], index: 9, kind: output, shape index: {}]
  %s10 = sld [smem:[#allocation0]]
  $region46: #{tpu_custom_call.1} parent=0
    _
  %s12 = ssub.s32 1, %s10
  %s13 = scalar_select 0, %s12, %s10
  // Predicated region
  $region2: #{tpu_custom_call.1} parent=0 // pred_check
    _
  $region3: #{tpu_custom_call.1} parent=0 // pred_check_branch
    %15 = sbr.rel (0) target = $region5
  $region4: #{tpu_custom_call.1} parent=0 // pred_region
    _
  $region5: #{tpu_custom_call.1} parent=0 // pred_fallthru
    _
  // Predicated region
  $region6: #{tpu_custom_call.1} parent=0 // pred_check
    _
  $region7: #{tpu_custom_call.1} parent=0 // pred_check_branch
    %17 = sbr.rel (0) target = $region9
  $region8: #{tpu_custom_call.1} parent=0 // pred_region
    _
  $region9: #{tpu_custom_call.1} parent=0 // pred_fallthru
    _
  // Predicated region
  $region10: #{tpu_custom_call.1} parent=0 // pred_check
    _
  $region11: #{tpu_custom_call.1} parent=0 // pred_check_branch
    %19 = sbr.rel (0) target = $region13
  $region12: #{tpu_custom_call.1} parent=0 // pred_region
    _
  $region13: #{tpu_custom_call.1} parent=0 // pred_fallthru
    _
  // Predicated region
  $region14: #{tpu_custom_call.1} parent=0 // pred_check
    _
  $region15: #{tpu_custom_call.1} parent=0 // pred_check_branch
    %21 = sbr.rel (0) target = $region17
  $region16: #{tpu_custom_call.1} parent=0 // pred_region
    _
  $region17: #{tpu_custom_call.1} parent=0 // pred_fallthru
    _
  // Predicated region
  $region18: #{tpu_custom_call.1} parent=0 // pred_check
    _
  $region19: #{tpu_custom_call.1} parent=0 // pred_check_branch
    %23 = sbr.rel (0) target = $region21
  $region20: #{tpu_custom_call.1} parent=0 // pred_region
    _
  $region21: #{tpu_custom_call.1} parent=0 // pred_fallthru
    _
  // Predicated region
  $region22: #{tpu_custom_call.1} parent=0 // pred_check
    _
  $region23: #{tpu_custom_call.1} parent=0 // pred_check_branch
    %25 = sbr.rel (0) target = $region25
  $region24: #{tpu_custom_call.1} parent=0 // pred_region
    _
  $region25: #{tpu_custom_call.1} parent=0 // pred_fallthru
    _
  // Predicated region
  $region26: #{tpu_custom_call.1} parent=0 // pred_check
    _
  $region27: #{tpu_custom_call.1} parent=0 // pred_check_branch
    %27 = sbr.rel (0) target = $region29
  $region28: #{tpu_custom_call.1} parent=0 // pred_region
    _
  $region29: #{tpu_custom_call.1} parent=0 // pred_fallthru
    _
  // Predicated region
  $region30: #{tpu_custom_call.1} parent=0 // pred_check
    _
  $region31: #{tpu_custom_call.1} parent=0 // pred_check_branch
    %29 = sbr.rel (0) target = $region33
  $region32: #{tpu_custom_call.1} parent=0 // pred_region
    _
  $region33: #{tpu_custom_call.1} parent=0 // pred_fallthru
    _
  // Predicated region
  $region34: #{tpu_custom_call.1} parent=0 // pred_check
    _
  $region35: #{tpu_custom_call.1} parent=0 // pred_check_branch
    %31 = sbr.rel (0) target = $region37
  $region36: #{tpu_custom_call.1} parent=0 // pred_region
    _
  $region37: #{tpu_custom_call.1} parent=0 // pred_fallthru
    _
  %v33 = vld [vmem:[%s0] sm:$0xff]
  %v34 = vld [vmem:[%s0 + $0x8] sm:$0xff]
  %v35 = vld [vmem:[%s0 + $0x10] sm:$0xff]
  %v36 = vld [vmem:[%s0 + $0x18] sm:$0xff]
  %v37 = vld [vmem:[%s0 + $0x20] sm:$0xff]
  %v38 = vld [vmem:[%s0 + $0x28] sm:$0xff]
  %v39 = vld [vmem:[%s0 + $0x30] sm:$0xff]
  %v40 = vunpack.c.0.s8 %v33
  %v41 = vunpack.c.0.s8 %v34
  %v42 = vunpack.c.0.s8 %v35
  %v43 = vunpack.c.0.s8 %v36
  %v44 = vunpack.c.0.s8 %v37
  %v45 = vunpack.c.0.s8 %v38
  %v46 = vunpack.c.0.s8 %v39
  %v47 = vunpack.c.1.s8 %v33
  %v48 = vunpack.c.1.s8 %v34
  %v49 = vunpack.c.1.s8 %v35
  %v50 = vunpack.c.1.s8 %v36
  %v51 = vunpack.c.1.s8 %v37
  %v52 = vunpack.c.1.s8 %v38
  %v53 = vunpack.c.1.s8 %v39
  %v54 = vunpack.c.2.s8 %v33
  %v55 = vunpack.c.2.s8 %v34
  %v56 = vunpack.c.2.s8 %v35
  %v57 = vunpack.c.2.s8 %v36
  %v58 = vunpack.c.2.s8 %v37
  %v59 = vunpack.c.2.s8 %v38
  %v60 = vunpack.c.2.s8 %v39
  %v61 = vunpack.c.3.s8 %v33
  %v62 = vunpack.c.3.s8 %v34
  %v63 = vunpack.c.3.s8 %v35
  %v64 = vunpack.c.3.s8 %v36
  %v65 = vunpack.c.3.s8 %v37
  %v66 = vunpack.c.3.s8 %v38
  %v67 = vunpack.c.3.s8 %v39
  %v68 = vcvt.s32.f32 %v40
  %v69 = vcvt.s32.f32 %v41
  %v70 = vcvt.s32.f32 %v42
  %v71 = vcvt.s32.f32 %v43
  %v72 = vcvt.s32.f32 %v44
  %v73 = vcvt.s32.f32 %v45
  %v74 = vcvt.s32.f32 %v46
  %v75 = vcvt.s32.f32 %v47
  %v76 = vcvt.s32.f32 %v48
  %v77 = vcvt.s32.f32 %v49
  %v78 = vcvt.s32.f32 %v50
  %v79 = vcvt.s32.f32 %v51
  %v80 = vcvt.s32.f32 %v52
  %v81 = vcvt.s32.f32 %v53
  %v82 = vcvt.s32.f32 %v54
  %v83 = vcvt.s32.f32 %v55
  %v84 = vcvt.s32.f32 %v56
  %v85 = vcvt.s32.f32 %v57
  %v86 = vcvt.s32.f32 %v58
  %v87 = vcvt.s32.f32 %v59
  %v88 = vcvt.s32.f32 %v60
  %v89 = vcvt.s32.f32 %v61
  %v90 = vcvt.s32.f32 %v62
  %v91 = vcvt.s32.f32 %v63
  %v92 = vcvt.s32.f32 %v64
  %v93 = vcvt.s32.f32 %v65
  %v94 = vcvt.s32.f32 %v66
  %v95 = vcvt.s32.f32 %v67
  %v96 = vmul.f32 %v68, 0.007874016
  %v97 = vmul.f32 %v69, 0.007874016
  %v98 = vmul.f32 %v70, 0.007874016
  %v99 = vmul.f32 %v71, 0.007874016
  %v100 = vmul.f32 %v72, 0.007874016
  %v101 = vmul.f32 %v73, 0.007874016
  %v102 = vmul.f32 %v74, 0.007874016
  %v103 = vmul.f32 %v75, 0.007874016
  %v104 = vmul.f32 %v76, 0.007874016
  %v105 = vmul.f32 %v77, 0.007874016
  %v106 = vmul.f32 %v78, 0.007874016
  %v107 = vmul.f32 %v79, 0.007874016
  %v108 = vmul.f32 %v80, 0.007874016
  %v109 = vmul.f32 %v81, 0.007874016
  %v110 = vmul.f32 %v82, 0.007874016
  %v111 = vmul.f32 %v83, 0.007874016
  %v112 = vmul.f32 %v84, 0.007874016
  %v113 = vmul.f32 %v85, 0.007874016
  %v114 = vmul.f32 %v86, 0.007874016
  %v115 = vmul.f32 %v87, 0.007874016
  %v116 = vmul.f32 %v88, 0.007874016
  %v117 = vmul.f32 %v89, 0.007874016
  %v118 = vmul.f32 %v90, 0.007874016
  %v119 = vmul.f32 %v91, 0.007874016
  %v120 = vmul.f32 %v92, 0.007874016
  %v121 = vmul.f32 %v93, 0.007874016
  %v122 = vmul.f32 %v94, 0.007874016
  %v123 = vmul.f32 %v95, 0.007874016
  %v124 = vpack.c.bf16 %v103, %v96
  %v125 = vpack.c.bf16 %v104, %v97
  %v126 = vpack.c.bf16 %v105, %v98
  %v127 = vpack.c.bf16 %v106, %v99
  %v128 = vpack.c.bf16 %v107, %v100
  %v129 = vpack.c.bf16 %v108, %v101
  %v130 = vpack.c.bf16 %v109, %v102
  %v131 = vpack.c.bf16 %v117, %v110
  %v132 = vpack.c.bf16 %v118, %v111
  %v133 = vpack.c.bf16 %v119, %v112
  %v134 = vpack.c.bf16 %v120, %v113
  %v135 = vpack.c.bf16 %v121, %v114
  %v136 = vpack.c.bf16 %v122, %v115
  %v137 = vpack.c.bf16 %v123, %v116
  %v138 = vld [vmem:[%s1] sm:$0xf]
  %v139 = vld [vmem:[%s1 + $0x4] sm:$0xf]
  %v140 = vld [vmem:[%s1 + $0x8] sm:$0xf]
  %v141 = vld [vmem:[%s1 + $0xc] sm:$0xf]
  %v142 = vld [vmem:[%s1 + $0x10] sm:$0xf]
  %v143 = vld [vmem:[%s1 + $0x14] sm:$0xf]
  %v144 = vld [vmem:[%s1 + $0x18] sm:$0xf]
  %v145 = vld [vmem:[%s1 + $0x1c] sm:$0xf]
  %v146 = vld [vmem:[%s1 + $0x20] sm:$0xf]
  %v147 = vld [vmem:[%s1 + $0x24] sm:$0xf]
  %v148 = vld [vmem:[%s1 + $0x28] sm:$0xf]
  %v149 = vld [vmem:[%s1 + $0x2c] sm:$0xf]
  %v150 = vld [vmem:[%s1 + $0x30] sm:$0xf]
  %v151 = vld [vmem:[%s1 + $0x34] sm:$0xf]
  %v152 = vld [vmem:[%s1 + $0x38] sm:$0xf]
  %v153 = vld [vmem:[%s1 + $0x3c] sm:$0xf]
  %v154 = vld [vmem:[%s1 + $0x40] sm:$0xf]
  %v155 = vld [vmem:[%s1 + $0x44] sm:$0xf]
  %v156 = vld [vmem:[%s1 + $0x48] sm:$0xf]
  %v157 = vld [vmem:[%s1 + $0x4c] sm:$0xf]
  %v158 = vld [vmem:[%s1 + $0x50] sm:$0xf]
  %v159 = vld [vmem:[%s1 + $0x54] sm:$0xf]
  %v160 = vld [vmem:[%s1 + $0x58] sm:$0xf]
  %v161 = vld [vmem:[%s1 + $0x5c] sm:$0xf]
  %v162 = vld [vmem:[%s1 + $0x60] sm:$0xf]
  %v163 = vld [vmem:[%s1 + $0x64] sm:$0xf]
  %v164 = vld [vmem:[%s1 + $0x68] sm:$0xf]
  %v165 = vld [vmem:[%s1 + $0x6c] sm:$0xf]
  %v166 = vld [vmem:[%s1 + $0x70] sm:$0xf]
  %v167 = vld [vmem:[%s1 + $0x74] sm:$0xf]
  %v168 = vld [vmem:[%s1 + $0x78] sm:$0xf]
  %v169 = vld [vmem:[%s1 + $0x7c] sm:$0xf]
  %v170 = vld [vmem:[%s1 + $0x80] sm:$0xf]
  %v171 = vld [vmem:[%s1 + $0x84] sm:$0xf]
  %v172 = vld [vmem:[%s1 + $0x88] sm:$0xf]
  %v173 = vld [vmem:[%s1 + $0x8c] sm:$0xf]
  %v174 = vld [vmem:[%s1 + $0x90] sm:$0xf]
  %v175 = vld [vmem:[%s1 + $0x94] sm:$0xf]
  %v176 = vld [vmem:[%s1 + $0x98] sm:$0xf]
  %v177 = vld [vmem:[%s1 + $0x9c] sm:$0xf]
  %v178 = vld [vmem:[%s1 + $0xa0] sm:$0xf]
  %v179 = vld [vmem:[%s1 + $0xa4] sm:$0xf]
  %v180 = vld [vmem:[%s1 + $0xa8] sm:$0xf]
  %v181 = vld [vmem:[%s1 + $0xac] sm:$0xf]
  %v182 = vld [vmem:[%s1 + $0xb0] sm:$0xf]
  %v183 = vld [vmem:[%s1 + $0xb4] sm:$0xf]
  %v184 = vld [vmem:[%s1 + $0xb8] sm:$0xf]
  %v185 = vld [vmem:[%s1 + $0xbc] sm:$0xf]
  %v186 = vld [vmem:[%s1 + $0xc0] sm:$0xf]
  %v187 = vld [vmem:[%s1 + $0xc4] sm:$0xf]
  %v188 = vld [vmem:[%s1 + $0xc8] sm:$0xf]
  %v189 = vld [vmem:[%s1 + $0xcc] sm:$0xf]
  %v190 = vld [vmem:[%s1 + $0xd0] sm:$0xf]
  %v191 = vld [vmem:[%s1 + $0xd4] sm:$0xf]
  %v192 = vld [vmem:[%s1 + $0xd8] sm:$0xf]
  %v193 = vld [vmem:[%s1 + $0xdc] sm:$0xf]
  %v194 = vld [vmem:[%s1 + $0xe0] sm:$0xf]
  %v195 = vld [vmem:[%s1 + $0xe4] sm:$0xf]
  %v196 = vld [vmem:[%s1 + $0xe8] sm:$0xf]
  %v197 = vld [vmem:[%s1 + $0xec] sm:$0xf]
  %v198 = vld [vmem:[%s1 + $0xf0] sm:$0xf]
  %v199 = vld [vmem:[%s1 + $0xf4] sm:$0xf]
  %v200 = vld [vmem:[%s1 + $0xf8] sm:$0xf]
  %v201 = vld [vmem:[%s1 + $0xfc] sm:$0xf]
  %v202 = vld [vmem:[%s1 + $0x100] sm:$0xf]
  %v203 = vld [vmem:[%s1 + $0x104] sm:$0xf]
  %v204 = vld [vmem:[%s1 + $0x108] sm:$0xf]
  %v205 = vld [vmem:[%s1 + $0x10c] sm:$0xf]
  %v206 = vld [vmem:[%s1 + $0x110] sm:$0xf]
  %v207 = vld [vmem:[%s1 + $0x114] sm:$0xf]
  %v208 = vld [vmem:[%s1 + $0x118] sm:$0xf]
  %v209 = vld [vmem:[%s1 + $0x11c] sm:$0xf]
  %v210 = vld [vmem:[%s1 + $0x120] sm:$0xf]
  %v211 = vld [vmem:[%s1 + $0x124] sm:$0xf]
  %v212 = vld [vmem:[%s1 + $0x128] sm:$0xf]
  %v213 = vld [vmem:[%s1 + $0x12c] sm:$0xf]
  %v214 = vld [vmem:[%s1 + $0x130] sm:$0xf]
  %v215 = vld [vmem:[%s1 + $0x134] sm:$0xf]
  %v216 = vld [vmem:[%s1 + $0x138] sm:$0xf]
  %v217 = vld [vmem:[%s1 + $0x13c] sm:$0xf]
  %v218 = vld [vmem:[%s1 + $0x140] sm:$0xf]
  %v219 = vld [vmem:[%s1 + $0x144] sm:$0xf]
  %v220 = vld [vmem:[%s1 + $0x148] sm:$0xf]
  %v221 = vld [vmem:[%s1 + $0x14c] sm:$0xf]
  %v222 = vld [vmem:[%s1 + $0x150] sm:$0xf]
  %v223 = vld [vmem:[%s1 + $0x154] sm:$0xf]
  %v224 = vld [vmem:[%s1 + $0x158] sm:$0xf]
  %v225 = vld [vmem:[%s1 + $0x15c] sm:$0xf]
  %v226 = vld [vmem:[%s1 + $0x160] sm:$0xf]
  %v227 = vld [vmem:[%s1 + $0x164] sm:$0xf]
  %v228 = vld [vmem:[%s1 + $0x168] sm:$0xf]
  %v229 = vld [vmem:[%s1 + $0x16c] sm:$0xf]
  %v230 = vld [vmem:[%s1 + $0x170] sm:$0xf]
  %v231 = vld [vmem:[%s1 + $0x174] sm:$0xf]
  %v232 = vld [vmem:[%s1 + $0x178] sm:$0xf]
  %v233 = vld [vmem:[%s1 + $0x17c] sm:$0xf]
  %v234 = vld [vmem:[%s1 + $0x180] sm:$0xf]
  %v235 = vld [vmem:[%s1 + $0x184] sm:$0xf]
  %v236 = vld [vmem:[%s2] sm:$0x1]
  %v238 = vperm.slane %v236, 0
  %v338 = vunpack.c.l.b16 %v138
  %v339 = vunpack.c.l.b16 %v139
  %v340 = vunpack.c.l.b16 %v140
  %v341 = vunpack.c.l.b16 %v141
  %v342 = vunpack.c.l.b16 %v142
  %v343 = vunpack.c.l.b16 %v143
  %v344 = vunpack.c.l.b16 %v144
  %v345 = vunpack.c.l.b16 %v145
  %v346 = vunpack.c.l.b16 %v146
  %v347 = vunpack.c.l.b16 %v147
  %v348 = vunpack.c.l.b16 %v148
  %v349 = vunpack.c.l.b16 %v149
  %v350 = vunpack.c.l.b16 %v150
  %v351 = vunpack.c.l.b16 %v151
  %v352 = vunpack.c.l.b16 %v152
  %v353 = vunpack.c.l.b16 %v153
  %v354 = vunpack.c.l.b16 %v154
  %v355 = vunpack.c.l.b16 %v155
  %v356 = vunpack.c.l.b16 %v156
  %v357 = vunpack.c.l.b16 %v157
  %v358 = vunpack.c.l.b16 %v158
  %v359 = vunpack.c.l.b16 %v159
  %v360 = vunpack.c.l.b16 %v160
  %v361 = vunpack.c.l.b16 %v161
  %v362 = vunpack.c.l.b16 %v162
  %v363 = vunpack.c.l.b16 %v163
  %v364 = vunpack.c.l.b16 %v164
  %v365 = vunpack.c.l.b16 %v165
  %v366 = vunpack.c.l.b16 %v166
  %v367 = vunpack.c.l.b16 %v167
  %v368 = vunpack.c.l.b16 %v168
  %v369 = vunpack.c.l.b16 %v169
  %v370 = vunpack.c.l.b16 %v170
  %v371 = vunpack.c.l.b16 %v171
  %v372 = vunpack.c.l.b16 %v172
  %v373 = vunpack.c.l.b16 %v173
  %v374 = vunpack.c.l.b16 %v174
  %v375 = vunpack.c.l.b16 %v175
  %v376 = vunpack.c.l.b16 %v176
  %v377 = vunpack.c.l.b16 %v177
  %v378 = vunpack.c.l.b16 %v178
  %v379 = vunpack.c.l.b16 %v179
  %v380 = vunpack.c.l.b16 %v180
  %v381 = vunpack.c.l.b16 %v181
  %v382 = vunpack.c.l.b16 %v182
  %v383 = vunpack.c.l.b16 %v183
  %v384 = vunpack.c.l.b16 %v184
  %v385 = vunpack.c.l.b16 %v185
  %v386 = vunpack.c.l.b16 %v186
  %v387 = vunpack.c.l.b16 %v187
  %v388 = vunpack.c.l.b16 %v188
  %v389 = vunpack.c.l.b16 %v189
  %v390 = vunpack.c.l.b16 %v190
  %v391 = vunpack.c.l.b16 %v191
  %v392 = vunpack.c.l.b16 %v192
  %v393 = vunpack.c.l.b16 %v193
  %v394 = vunpack.c.l.b16 %v194
  %v395 = vunpack.c.l.b16 %v195
  %v396 = vunpack.c.l.b16 %v196
  %v397 = vunpack.c.l.b16 %v197
  %v398 = vunpack.c.l.b16 %v198
  %v399 = vunpack.c.l.b16 %v199
  %v400 = vunpack.c.l.b16 %v200
  %v401 = vunpack.c.l.b16 %v201
  %v402 = vunpack.c.l.b16 %v202
  %v403 = vunpack.c.l.b16 %v203
  %v404 = vunpack.c.l.b16 %v204
  %v405 = vunpack.c.l.b16 %v205
  %v406 = vunpack.c.l.b16 %v206
  %v407 = vunpack.c.l.b16 %v207
  %v408 = vunpack.c.l.b16 %v208
  %v409 = vunpack.c.l.b16 %v209
  %v410 = vunpack.c.l.b16 %v210
  %v411 = vunpack.c.l.b16 %v211
  %v412 = vunpack.c.l.b16 %v212
  %v413 = vunpack.c.l.b16 %v213
  %v414 = vunpack.c.l.b16 %v214
  %v415 = vunpack.c.l.b16 %v215
  %v416 = vunpack.c.l.b16 %v216
  %v417 = vunpack.c.l.b16 %v217
  %v418 = vunpack.c.l.b16 %v218
  %v419 = vunpack.c.l.b16 %v219
  %v420 = vunpack.c.l.b16 %v220
  %v421 = vunpack.c.l.b16 %v221
  %v422 = vunpack.c.l.b16 %v222
  %v423 = vunpack.c.l.b16 %v223
  %v424 = vunpack.c.l.b16 %v224
  %v425 = vunpack.c.l.b16 %v225
  %v426 = vunpack.c.l.b16 %v226
  %v427 = vunpack.c.l.b16 %v227
  %v428 = vunpack.c.l.b16 %v228
  %v429 = vunpack.c.l.b16 %v229
  %v430 = vunpack.c.l.b16 %v230
  %v431 = vunpack.c.l.b16 %v231
  %v432 = vunpack.c.l.b16 %v232
  %v433 = vunpack.c.l.b16 %v233
  %v434 = vunpack.c.l.b16 %v234
  %v435 = vunpack.c.l.b16 %v235
  %v436 = vpack.c.b16 %v339, %v338
  %v437 = vpack.c.b16 %v341, %v340
  %v438 = vpack.c.b16 %v343, %v342
  %v439 = vpack.c.b16 %v345, %v344
  %v440 = vpack.c.b16 %v347, %v346
  %v441 = vpack.c.b16 %v349, %v348
  %v442 = vpack.c.b16 %v351, %v350
  %v443 = vpack.c.b16 %v353, %v352
  %v444 = vpack.c.b16 %v355, %v354
  %v445 = vpack.c.b16 %v357, %v356
  %v446 = vpack.c.b16 %v359, %v358
  %v447 = vpack.c.b16 %v361, %v360
  %v448 = vpack.c.b16 %v363, %v362
  %v449 = vpack.c.b16 %v365, %v364
  %v450 = vpack.c.b16 %v367, %v366
  %v451 = vpack.c.b16 %v369, %v368
  %v452 = vpack.c.b16 %v371, %v370
  %v453 = vpack.c.b16 %v373, %v372
  %v454 = vpack.c.b16 %v375, %v374
  %v455 = vpack.c.b16 %v377, %v376
  %v456 = vpack.c.b16 %v379, %v378
  %v457 = vpack.c.b16 %v381, %v380
  %v458 = vpack.c.b16 %v383, %v382
  %v459 = vpack.c.b16 %v385, %v384
  %v460 = vpack.c.b16 %v387, %v386
  %v461 = vpack.c.b16 %v389, %v388
  %v462 = vpack.c.b16 %v391, %v390
  %v463 = vpack.c.b16 %v393, %v392
  %v464 = vpack.c.b16 %v395, %v394
  %v465 = vpack.c.b16 %v397, %v396
  %v466 = vpack.c.b16 %v399, %v398
  %v467 = vpack.c.b16 %v401, %v400
  %v468 = vpack.c.b16 %v403, %v402
  %v469 = vpack.c.b16 %v405, %v404
  %v470 = vpack.c.b16 %v407, %v406
  %v471 = vpack.c.b16 %v409, %v408
  %v472 = vpack.c.b16 %v411, %v410
  %v473 = vpack.c.b16 %v413, %v412
  %v474 = vpack.c.b16 %v415, %v414
  %v475 = vpack.c.b16 %v417, %v416
  %v476 = vpack.c.b16 %v419, %v418
  %v477 = vpack.c.b16 %v421, %v420
  %v478 = vpack.c.b16 %v423, %v422
  %v479 = vpack.c.b16 %v425, %v424
  %v480 = vpack.c.b16 %v427, %v426
  %v481 = vpack.c.b16 %v429, %v428
  %v482 = vpack.c.b16 %v431, %v430
  %v483 = vpack.c.b16 %v433, %v432
  %v484 = vpack.c.b16 %v435, %v434
  %vm534 = vcmask 130048
  %v536 = vsel %vm534, %v130, 0
  %v539 = vsel %vm534, %v137, 0
  %541 = vmatpush.bf16.msra.mxu0 %v443
  %542 = vmatpush.bf16.msra.mxu0 %v442
  %543 = vmatpush.bf16.msra.mxu0 %v441
  %544 = vmatpush.bf16.msra.mxu0 %v440
  %545 = vmatpush.bf16.msra.mxu0 %v439
  %546 = vmatpush.bf16.msra.mxu0 %v438
  %547 = vmatpush.bf16.msra.mxu0 %v437
  %548 = vmatpush.bf16.msra.mxu0 %v436
  %549 = vmatmul.bf16.gmra.mxu0 %v124
  %v550 = vpop.f32.mrf.mxu0
  %v551 = vadd.f32 %v238, %v550
  %v552 = vpop.f32.mrf.mxu0
  %v553 = vadd.f32 %v238, %v552
  %554 = vmatmul.bf16.gmra.mxu0 %v131
  %v555 = vpop.f32.mrf.mxu0
  %v556 = vadd.f32 %v238, %v555
  %v557 = vpop.f32.mrf.mxu0
  %v558 = vadd.f32 %v238, %v557
  %559 = vdwg.mxu0
  %560 = vmatpush.bf16.msra.mxu0 %v451
  %561 = vmatpush.bf16.msra.mxu0 %v450
  %562 = vmatpush.bf16.msra.mxu0 %v449
  %563 = vmatpush.bf16.msra.mxu0 %v448
  %564 = vmatpush.bf16.msra.mxu0 %v447
  %565 = vmatpush.bf16.msra.mxu0 %v446
  %566 = vmatpush.bf16.msra.mxu0 %v445
  %567 = vmatpush.bf16.msra.mxu0 %v444
  %568 = vmatmul.bf16.gmra.mxu0 %v125
  %v569 = vpop.f32.mrf.mxu0
  %v570 = vadd.f32 %v551, %v569
  %v571 = vpop.f32.mrf.mxu0
  %v572 = vadd.f32 %v553, %v571
  %573 = vmatmul.bf16.gmra.mxu0 %v132
  %v574 = vpop.f32.mrf.mxu0
  %v575 = vadd.f32 %v556, %v574
  %v576 = vpop.f32.mrf.mxu0
  %v577 = vadd.f32 %v558, %v576
  %578 = vdwg.mxu0
  %579 = vmatpush.bf16.msra.mxu0 %v459
  %580 = vmatpush.bf16.msra.mxu0 %v458
  %581 = vmatpush.bf16.msra.mxu0 %v457
  %582 = vmatpush.bf16.msra.mxu0 %v456
  %583 = vmatpush.bf16.msra.mxu0 %v455
  %584 = vmatpush.bf16.msra.mxu0 %v454
  %585 = vmatpush.bf16.msra.mxu0 %v453
  %586 = vmatpush.bf16.msra.mxu0 %v452
  %587 = vmatmul.bf16.gmra.mxu0 %v126
  %v588 = vpop.f32.mrf.mxu0
  %v589 = vadd.f32 %v570, %v588
  %v590 = vpop.f32.mrf.mxu0
  %v591 = vadd.f32 %v572, %v590
  %592 = vmatmul.bf16.gmra.mxu0 %v133
  %v593 = vpop.f32.mrf.mxu0
  %v594 = vadd.f32 %v575, %v593
  %v595 = vpop.f32.mrf.mxu0
  %v596 = vadd.f32 %v577, %v595
  %597 = vdwg.mxu0
  %598 = vmatpush.bf16.msra.mxu0 %v467
  %599 = vmatpush.bf16.msra.mxu0 %v466
  %600 = vmatpush.bf16.msra.mxu0 %v465
  %601 = vmatpush.bf16.msra.mxu0 %v464
  %602 = vmatpush.bf16.msra.mxu0 %v463
  %603 = vmatpush.bf16.msra.mxu0 %v462
  %604 = vmatpush.bf16.msra.mxu0 %v461
  %605 = vmatpush.bf16.msra.mxu0 %v460
  %606 = vmatmul.bf16.gmra.mxu0 %v127
  %v607 = vpop.f32.mrf.mxu0
  %v608 = vadd.f32 %v589, %v607
  %v609 = vpop.f32.mrf.mxu0
  %v610 = vadd.f32 %v591, %v609
  %611 = vmatmul.bf16.gmra.mxu0 %v134
  %v612 = vpop.f32.mrf.mxu0
  %v613 = vadd.f32 %v594, %v612
  %v614 = vpop.f32.mrf.mxu0
  %v615 = vadd.f32 %v596, %v614
  %616 = vdwg.mxu0
  %617 = vmatpush.bf16.msra.mxu0 %v475
  %618 = vmatpush.bf16.msra.mxu0 %v474
  %619 = vmatpush.bf16.msra.mxu0 %v473
  %620 = vmatpush.bf16.msra.mxu0 %v472
  %621 = vmatpush.bf16.msra.mxu0 %v471
  %622 = vmatpush.bf16.msra.mxu0 %v470
  %623 = vmatpush.bf16.msra.mxu0 %v469
  %624 = vmatpush.bf16.msra.mxu0 %v468
  %625 = vmatmul.bf16.gmra.mxu0 %v128
  %v626 = vpop.f32.mrf.mxu0
  %v627 = vadd.f32 %v608, %v626
  %v628 = vpop.f32.mrf.mxu0
  %v629 = vadd.f32 %v610, %v628
  %630 = vmatmul.bf16.gmra.mxu0 %v135
  %v631 = vpop.f32.mrf.mxu0
  %v632 = vadd.f32 %v613, %v631
  %v633 = vpop.f32.mrf.mxu0
  %v634 = vadd.f32 %v615, %v633
  %635 = vdwg.mxu0
  %636 = vmatpush.bf16.msra.mxu0 %v483
  %637 = vmatpush.bf16.msra.mxu0 %v482
  %638 = vmatpush.bf16.msra.mxu0 %v481
  %639 = vmatpush.bf16.msra.mxu0 %v480
  %640 = vmatpush.bf16.msra.mxu0 %v479
  %641 = vmatpush.bf16.msra.mxu0 %v478
  %642 = vmatpush.bf16.msra.mxu0 %v477
  %643 = vmatpush.bf16.msra.mxu0 %v476
  %644 = vmatmul.bf16.gmra.mxu0 %v129
  %v645 = vpop.f32.mrf.mxu0
  %v646 = vadd.f32 %v627, %v645
  %v647 = vpop.f32.mrf.mxu0
  %v648 = vadd.f32 %v629, %v647
  %649 = vmatmul.bf16.gmra.mxu0 %v136
  %v650 = vpop.f32.mrf.mxu0
  %v651 = vadd.f32 %v632, %v650
  %v652 = vpop.f32.mrf.mxu0
  %v653 = vadd.f32 %v634, %v652
  %654 = vdwg.mxu0
  %655 = vmatpush.bf16.msra.mxu0 0
  %656 = vmatpush.bf16.msra.mxu0 0
  %657 = vmatpush.bf16.msra.mxu0 0
  %658 = vmatpush.bf16.msra.mxu0 0
  %659 = vmatpush.bf16.msra.mxu0 0
  %660 = vmatpush.bf16.msra.mxu0 0
  %661 = vmatpush.bf16.msra.mxu0 0
  %662 = vmatpush.bf16.msra.mxu0 %v484
  %663 = vmatmul.bf16.gmra.mxu0 %v536
  %v664 = vpop.f32.mrf.mxu0
  %v665 = vadd.f32 %v646, %v664
  %v666 = vpop.f32.mrf.mxu0
  %v667 = vadd.f32 %v648, %v666
  %668 = vmatmul.bf16.gmra.mxu0 %v539
  %v669 = vpop.f32.mrf.mxu0
  %v670 = vadd.f32 %v651, %v669
  %v671 = vpop.f32.mrf.mxu0
  %v672 = vadd.f32 %v653, %v671
  %673 = vdwg.mxu0
  %v674 = vmax.f32 %v665, 0.0
  %v675 = vmax.f32 %v667, 0.0
  %v676 = vmax.f32 %v670, 0.0
  %v677 = vmax.f32 %v672, 0.0
  %v678 = vpack.c.bf16 %v675, %v674
  %v679 = vpack.c.bf16 %v677, %v676
  %v680 = vld [vmem:[%s3] sm:$0xf]
  %v681 = vld [vmem:[%s3 + $0x4] sm:$0xf]
  %v682 = vld [vmem:[%s3 + $0x8] sm:$0xf]
  %v683 = vld [vmem:[%s3 + $0xc] sm:$0x7]
  %v684 = vld [vmem:[%s4] sm:$0x1]
  %v686 = vperm.slane %v684, 0
  %v692 = vunpack.c.l.b16 %v680
  %v693 = vunpack.c.l.b16 %v681
  %v694 = vunpack.c.l.b16 %v682
  %v695 = vunpack.c.l.b16 %v683
  %v696 = vpack.c.b16 %v693, %v692
  %v697 = vpack.c.b16 %v695, %v694
  %vm699 = vcmask 244736
  %v701 = vsel %vm699, %v678, 0
  %v704 = vsel %vm699, %v679, 0
  %vm706 = vcmask 1046528
  %v708 = vsel %vm706, %v697, 0
  %710 = vmatpush.bf16.msra.mxu0 0
  %711 = vmatpush.bf16.msra.mxu0 0
  %712 = vmatpush.bf16.msra.mxu0 0
  %713 = vmatpush.bf16.msra.mxu0 0
  %714 = vmatpush.bf16.msra.mxu0 0
  %715 = vmatpush.bf16.msra.mxu0 0
  %716 = vmatpush.bf16.msra.mxu0 %v708
  %717 = vmatpush.bf16.msra.mxu0 %v696
  %718 = vmatmul.bf16.gmra.mxu0 %v701
  %v719 = vpop.f32.mrf.mxu0
  %v720 = vadd.f32 %v686, %v719
  %v721 = vpop.f32.mrf.mxu0
  %v722 = vadd.f32 %v686, %v721
  %723 = vmatmul.bf16.gmra.mxu0 %v704
  %v724 = vpop.f32.mrf.mxu0
  %v725 = vadd.f32 %v686, %v724
  %v726 = vpop.f32.mrf.mxu0
  %v727 = vadd.f32 %v686, %v726
  %728 = vdwg.mxu0
  %v729 = vmax.f32 %v720, 0.0
  %v730 = vmax.f32 %v722, 0.0
  %v731 = vmax.f32 %v725, 0.0
  %v732 = vmax.f32 %v727, 0.0
  %v733 = vpack.c.bf16 %v730, %v729
  %v734 = vpack.c.bf16 %v732, %v731
  %v735 = vld [vmem:[%s5] sm:$0xf]
  %v736 = vld [vmem:[%s5 + $0x4] sm:$0xf]
  %v737 = vld [vmem:[%s5 + $0x8] sm:$0xf]
  %v738 = vld [vmem:[%s5 + $0xc] sm:$0x7]
  %v739 = vld [vmem:[%s6] sm:$0x1]
  %v741 = vperm.slane %v739, 0
  %v747 = vunpack.c.l.b16 %v735
  %v748 = vunpack.c.l.b16 %v736
  %v749 = vunpack.c.l.b16 %v737
  %v750 = vunpack.c.l.b16 %v738
  %v751 = vpack.c.b16 %v748, %v747
  %v752 = vpack.c.b16 %v750, %v749
  %v755 = vsel %vm699, %v733, 0
  %v758 = vsel %vm699, %v734, 0
  %v761 = vsel %vm706, %v752, 0
  %763 = vmatpush.bf16.msra.mxu0 0
  %764 = vmatpush.bf16.msra.mxu0 0
  %765 = vmatpush.bf16.msra.mxu0 0
  %766 = vmatpush.bf16.msra.mxu0 0
  %767 = vmatpush.bf16.msra.mxu0 0
  %768 = vmatpush.bf16.msra.mxu0 0
  %769 = vmatpush.bf16.msra.mxu0 %v761
  %770 = vmatpush.bf16.msra.mxu0 %v751
  %771 = vmatmul.bf16.gmra.mxu0 %v755
  %v772 = vpop.f32.mrf.mxu0
  %v773 = vadd.f32 %v741, %v772
  %v774 = vpop.f32.mrf.mxu0
  %v775 = vadd.f32 %v741, %v774
  %776 = vmatmul.bf16.gmra.mxu0 %v758
  %v777 = vpop.f32.mrf.mxu0
  %v778 = vadd.f32 %v741, %v777
  %v779 = vpop.f32.mrf.mxu0
  %v780 = vadd.f32 %v741, %v779
  %781 = vdwg.mxu0
  %v782 = vmax.f32 %v773, 0.0
  %v783 = vmax.f32 %v775, 0.0
  %v784 = vmax.f32 %v778, 0.0
  %v785 = vmax.f32 %v780, 0.0
  %v786 = vpack.c.bf16 %v783, %v782
  %v787 = vpack.c.bf16 %v785, %v784
  %v788 = vld [vmem:[%s7] sm:$0xf]
  %v789 = vld [vmem:[%s7 + $0x4] sm:$0x1]
  %v790 = vld [vmem:[%s8] sm:$0x1]
  %v792 = vperm.slane %v790, 0
  %v796 = vunpack.c.l.b16 %v788
  %v797 = vunpack.c.l.b16 %v789
  %v798 = vpack.c.b16 %v797, %v796
  %vm799 = vcmask 80896
  %v801 = vsel %vm799, %v786, 0
  %v804 = vsel %vm799, %v787, 0
  %vm806 = vcmask 1044480
  %v808 = vsel %vm806, %v798, 0
  %810 = vmatpush.bf16.msra.mxu0 0
  %811 = vmatpush.bf16.msra.mxu0 0
  %812 = vmatpush.bf16.msra.mxu0 0
  %813 = vmatpush.bf16.msra.mxu0 0
  %814 = vmatpush.bf16.msra.mxu0 0
  %815 = vmatpush.bf16.msra.mxu0 0
  %816 = vmatpush.bf16.msra.mxu0 0
  %817 = vmatpush.bf16.msra.mxu0 %v808
  %818 = vmatmul.bf16.gmra.mxu0 %v801
  %v819 = vpop.f32.mrf.mxu0
  %v820 = vadd.f32 %v792, %v819
  %v821 = vpop.f32.mrf.mxu0
  %v822 = vadd.f32 %v792, %v821
  %823 = vmatmul.bf16.gmra.mxu0 %v804
  %v824 = vpop.f32.mrf.mxu0
  %v825 = vadd.f32 %v792, %v824
  %v826 = vpop.f32.mrf.mxu0
  %v827 = vadd.f32 %v792, %v826
  %828 = vdwg.mxu0
  %v829 = vsel %vm799, %v820, -inf
  %830 = vmax.xlane.f32.xlu0 %v829
  %v831 = vpop.xlane.xlu0 %830
  %v832 = vsel %vm799, %v822, -inf
  %833 = vmax.xlane.f32.xlu0 %v832
  %v834 = vpop.xlane.xlu0 %833
  %v835 = vsel %vm799, %v825, -inf
  %836 = vmax.xlane.f32.xlu0 %v835
  %v837 = vpop.xlane.xlu0 %836
  %v838 = vsel %vm799, %v827, -inf
  %839 = vmax.xlane.f32.xlu0 %v838
  %v840 = vpop.xlane.xlu0 %839
  %v841 = vsub.f32 %v820, %v831
  %v842 = vsub.f32 %v822, %v834
  %v843 = vsub.f32 %v825, %v837
  %v844 = vsub.f32 %v827, %v840
  %v845 = vmul.f32 %v841, 1.442695
  %v846 = vpow.pop %v845
  %v847 = vmul.f32 %v842, 1.442695
  %v848 = vpow.pop %v847
  %v849 = vmul.f32 %v843, 1.442695
  %v850 = vpow.pop %v849
  %v851 = vmul.f32 %v844, 1.442695
  %v852 = vpow.pop %v851
  %v853 = vsel %vm799, %v846, 0.0
  %854 = vadd.xlane.f32.xlu0 %v853
  %v855 = vpop.xlane.xlu0 %854
  %v856 = vsel %vm799, %v848, 0.0
  %857 = vadd.xlane.f32.xlu0 %v856
  %v858 = vpop.xlane.xlu0 %857
  %v859 = vsel %vm799, %v850, 0.0
  %860 = vadd.xlane.f32.xlu0 %v859
  %v861 = vpop.xlane.xlu0 %860
  %v862 = vsel %vm799, %v852, 0.0
  %863 = vadd.xlane.f32.xlu0 %v862
  %v864 = vpop.xlane.xlu0 %863
  %v865 = vlog2.pop %v855
  %v866 = vmul.f32 %v865, 0.6931472
  %v867 = vlog2.pop %v858
  %v868 = vmul.f32 %v867, 0.6931472
  %v869 = vlog2.pop %v861
  %v870 = vmul.f32 %v869, 0.6931472
  %v871 = vlog2.pop %v864
  %v872 = vmul.f32 %v871, 0.6931472
  %v873 = vsub.f32 %v841, %v866
  %v874 = vsub.f32 %v842, %v868
  %v875 = vsub.f32 %v843, %v870
  %v876 = vsub.f32 %v844, %v872
  %877 = vst.msk [vmem:[%s9] sm:$0xff] %vm799, %v873
  %878 = vst.msk [vmem:[%s9 + $0x8] sm:$0xff] %vm799, %v874
  %879 = vst.msk [vmem:[%s9 + $0x10] sm:$0xff] %vm799, %v875
  %880 = vst.msk [vmem:[%s9 + $0x18] sm:$0xff] %vm799, %v876
  // Predicated region
  $region38: #{tpu_custom_call.1} parent=0 // pred_check
    _
  $region39: #{tpu_custom_call.1} parent=0 // pred_check_branch
    %882 = sbr.rel (0) target = $region41
  $region40: #{tpu_custom_call.1} parent=0 // pred_region
    _
  $region41: #{tpu_custom_call.1} parent=0 // pred_fallthru
    _
  // Predicated region
  $region42: #{tpu_custom_call.1} parent=0 // pred_check
    _
  $region43: #{tpu_custom_call.1} parent=0 // pred_check_branch
    %884 = sbr.rel (0) target = $region45
  $region44: #{tpu_custom_call.1} parent=0 // pred_region
    _
  $region45: #{tpu_custom_call.1} parent=0 // pred_fallthru
    _

</llo_original>
